<compile_context>
chip_gen: v6e
topology: v6e:2x2x1
jax: 0.10.0
libtpu: 0.0.40
codegen_flags: <defaults>
</compile_context>

<pallas_src>
import jax
import jax.numpy as jnp
from jax.experimental import pallas as pl
from jax.experimental.pallas import tpu as pltpu

_NEG_BIG = -1e30  # bias padding for fake classes; exp(x - max) == 0 exactly in f32


def _round_up(n: int, m: int) -> int:
    return ((n + m - 1) // m) * m


def _mitcnn_classifier_kernel(x_ref, w_ref, b_ref, o_ref):
    # logits = x_tile @ W + b   (MXU matmul, f32 accumulation)
    logits = jnp.dot(
        x_ref[...], w_ref[...], preferred_element_type=jnp.float32
    ) + b_ref[...]                      # (1, C_pad) broadcasts over the batch tile

    # Numerically stable log-softmax over the class dimension (f32 throughout).
    # Padded classes carry a -1e30 bias -> exp(shifted) == 0 exactly, so they
    # do not perturb the LSE of the real classes.
    m = jnp.max(logits, axis=1, keepdims=True)
    shifted = logits - m
    lse = jnp.log(jnp.sum(jnp.exp(shifted), axis=1, keepdims=True))
    o_ref[...] = (shifted - lse).astype(o_ref.dtype)


def prepare_classifier_params(w, b, *, use_bf16: bool = False):
    """One-time (init-time) padding/casting of fc2 parameters.

    Hoisted out of the forward path so W/b are not re-padded (extra HBM copy)
    on every call.
      w: (E, C) -> (E, C_pad)   zero-padded columns, optionally bf16
      b: (C,)   -> (1, C_pad)   -1e30-padded entries, always f32
    """
    E, C = w.shape
    C_pad = _round_up(max(C, 128), 128)
    w_dtype = jnp.bfloat16 if use_bf16 else jnp.float32
    w_p = jnp.pad(w.astype(w_dtype), ((0, 0), (0, C_pad - C)))
    b_p = jnp.pad(
        b.astype(jnp.float32).reshape(1, C),
        ((0, 0), (0, C_pad - C)),
        mode="constant",
        constant_values=_NEG_BIG,
    )
    return w_p, b_p


def _choose_batch_tile(B, E, C_pad, x_itemsize, w_itemsize,
                       *, tb_max=1024, vmem_budget=24 << 20):
    # Large tiles amortize the ~0.35us/step grid overhead.
    TB = min(tb_max, _round_up(B, 8))
    # Keep >= 2 grid steps when the batch allows it (v7x megacore sharding +
    # real prefetch overlap).
    two_step = _round_up(-(-B // 2), 8)
    TB = min(TB, max(two_step, 8))
    # Respect VMEM: double-buffered x/out tiles + single-buffered W/bias.
    def bytes_needed(tb):
        return (2 * tb * E * x_itemsize + 2 * tb * C_pad * 4
                + E * C_pad * w_itemsize + C_pad * 4)
    while TB > 8 and bytes_needed(TB) > vmem_budget:
        TB = max(8, _round_up(TB // 2, 8))
    return TB


def mitcnn_classifier_forward(x, w_p, b_p, num_classes, *,
                              use_bf16: bool = False,
                              return_padded: bool = False):
    """x: (B, E); w_p: (E, C_pad); b_p: (1, C_pad) -> (B, num_classes) f32 log-probs."""
    B, E = x.shape
    C_pad = w_p.shape[1]

    x_dtype = jnp.bfloat16 if use_bf16 else jnp.float32
    x_p = x.astype(x_dtype)
    x_itemsize = jnp.dtype(x_dtype).itemsize
    w_itemsize = jnp.dtype(w_p.dtype).itemsize

    TB = _choose_batch_tile(B, E, C_pad, x_itemsize, w_itemsize)
    B_pad = _round_up(B, TB)
    if B_pad != B:
        x_p = jnp.pad(x_p, ((0, B_pad - B), (0, 0)))
    grid = (B_pad // TB,)

    # Explicit VMEM budget with headroom (v7x has only 64 MiB physical / TC).
    needed = (2 * TB * E * x_itemsize + 2 * TB * C_pad * 4
              + E * C_pad * w_itemsize + C_pad * 4)
    vmem_limit = int(min(max(needed + (8 << 20), 16 << 20), 48 << 20))

    cost = pl.CostEstimate(
        flops=2 * B_pad * E * C_pad + 5 * B_pad * C_pad,
        transcendentals=B_pad * (C_pad + 1),
        bytes_accessed=(B_pad * E * x_itemsize + E * C_pad * w_itemsize
                        + C_pad * 4 + B_pad * C_pad * 4),
    )

    out = pl.pallas_call(
        _mitcnn_classifier_kernel,
        out_shape=jax.ShapeDtypeStruct((B_pad, C_pad), jnp.float32),
        grid=grid,
        in_specs=[
            # x tile streamed per grid step (double-buffered by default).
            pl.BlockSpec((TB, E), lambda i: (i, 0)),
            # W and bias are VMEM-resident (constant index_map) -> single buffer.
            pl.BlockSpec((E, C_pad), lambda i: (0, 0), pipeline_mode=pl.Buffered(1)),
            pl.BlockSpec((1, C_pad), lambda i: (0, 0), pipeline_mode=pl.Buffered(1)),
        ],
        out_specs=pl.BlockSpec((TB, C_pad), lambda i: (i, 0)),
        compiler_params=pltpu.CompilerParams(
            dimension_semantics=("parallel",),
            vmem_limit_bytes=vmem_limit,
        ),
        cost_estimate=cost,
    )(x_p, w_p, b_p)

    if return_padded:
        # Padded rows/columns contain finite garbage (~-1e30 columns); the
        # consumer must slice [:B, :num_classes] itself.
        # TODO(synk): fuse the downstream consumer (NLL loss / argmax) into the
        # kernel so the padded log-prob slab is never written to HBM at all.
        return out
    return out[:B, :num_classes]


def reference_forward(x, w, b):
    logits = x @ w + b
    return jax.nn.log_softmax(logits, axis=1)


if __name__ == "__main__":
    key = jax.random.PRNGKey(0)
    k_x, k_x2, k_w, k_b = jax.random.split(key, 4)

    embedding_size = 256   # module default: Linear(256 -> 10)
    num_classes = 10

    # Deterministic parameter init (mimics nn.Linear uniform(-1/sqrt(E), 1/sqrt(E)))
    bound = 1.0 / (embedding_size ** 0.5)
    w = jax.random.uniform(
        k_w, (embedding_size, num_classes), minval=-bound, maxval=bound,
        dtype=jnp.float32)
    b = jax.random.uniform(
        k_b, (num_classes,), minval=-bound, maxval=bound, dtype=jnp.float32)

    # ---- f32 path, single tile -------------------------------------------
    w_p, b_p = prepare_classifier_params(w, b, use_bf16=False)

    x_small = jax.random.normal(k_x, (8, embedding_size), dtype=jnp.float32)
    out = jax.block_until_ready(
        mitcnn_classifier_forward(x_small, w_p, b_p, num_classes))
    ref = reference_forward(x_small, w, b)
    assert out.shape == (8, num_classes)
    assert jnp.allclose(out, ref, atol=1e-5, rtol=1e-5), "f32 mismatch (small)"

    # ---- f32 path, multi-tile grid (2 steps) + batch padding --------------
    x_med = jax.random.normal(k_x2, (50, embedding_size), dtype=jnp.float32)
    out_med = jax.block_until_ready(
        mitcnn_classifier_forward(x_med, w_p, b_p, num_classes))
    ref_med = reference_forward(x_med, w, b)
    assert out_med.shape == (50, num_classes)
    assert jnp.allclose(out_med, ref_med, atol=1e-5, rtol=1e-5), "f32 mismatch (tiled)"

    # ---- bf16 operand streams (halved HBM reads), f32 log-softmax ---------
    w_p16, b_p16 = prepare_classifier_params(w, b, use_bf16=True)
    out16 = jax.block_until_ready(
        mitcnn_classifier_forward(x_small, w_p16, b_p16, num_classes, use_bf16=True))
    assert out16.shape == (8, num_classes)
    assert jnp.allclose(out16, ref, atol=5e-2, rtol=0.0), "bf16 mismatch"

    print("KERNEL_OK")
</pallas_src>

<mosaic_0001>
module attributes {stable_mosaic.version = 11 : i64} {
  func.func @_mitcnn_classifier_kernel(%arg0: i32, %arg1: memref<8x256xf32, #tpu.memory_space<vmem>>, %arg2: memref<256x128xf32, #tpu.memory_space<vmem>>, %arg3: memref<1x128xf32, #tpu.memory_space<vmem>>, %arg4: memref<8x128xf32, #tpu.memory_space<vmem>>) attributes {dimension_semantics = [#tpu.dimension_semantics<parallel>], iteration_bounds = array<i64: 1>, scalar_prefetch = 0 : i64, scratch_operands = 0 : i64, tpu.core_type = #tpu.core_type<tc>, window_params = [{transform_indices = @transform_0, window_bounds = array<i64: 8, 256>}, {pipeline_mode = #tpu.pipeline_mode<synchronous>, transform_indices = @transform_1, window_bounds = array<i64: 256, 128>}, {pipeline_mode = #tpu.pipeline_mode<synchronous>, transform_indices = @transform_2, window_bounds = array<i64: 1, 128>}, {transform_indices = @transform_3, window_bounds = array<i64: 8, 128>}]} {
    %c0 = arith.constant 0 : index
    %c0_0 = arith.constant 0 : index
    %0 = vector.load %arg1[%c0, %c0_0] : memref<8x256xf32, #tpu.memory_space<vmem>>, vector<8x256xf32>
    %c0_1 = arith.constant 0 : index
    %c0_2 = arith.constant 0 : index
    %1 = vector.load %arg2[%c0_1, %c0_2] : memref<256x128xf32, #tpu.memory_space<vmem>>, vector<256x128xf32>
    %cst = arith.constant dense<0.000000e+00> : vector<8x128xf32>
    %2 = tpu.matmul %0, %1, %cst {dimension_numbers = #tpu.dot_dimension_numbers<[1], [0], [0], [1], [0, 0, 1, 1], [], []>} : vector<8x256xf32>, vector<256x128xf32>, vector<8x128xf32> -> vector<8x128xf32>
    %c0_3 = arith.constant 0 : index
    %c0_4 = arith.constant 0 : index
    %3 = vector.load %arg3[%c0_3, %c0_4] : memref<1x128xf32, #tpu.memory_space<vmem>>, vector<1x128xf32>
    %4 = vector.broadcast %3 : vector<1x128xf32> to vector<8x128xf32>
    %5 = arith.addf %2, %4 : vector<8x128xf32>
    %cst_5 = arith.constant dense<0xFF800000> : vector<8xf32>
    %6 = vector.multi_reduction <maximumf>, %5, %cst_5 [1] : vector<8x128xf32> to vector<8xf32>
    %7 = vector.shape_cast %6 : vector<8xf32> to vector<8x1xf32>
    %8 = vector.broadcast %7 : vector<8x1xf32> to vector<8x128xf32>
    %9 = arith.subf %5, %8 : vector<8x128xf32>
    %10 = math.exp %9 : vector<8x128xf32>
    %cst_6 = arith.constant dense<0.000000e+00> : vector<8xf32>
    %11 = vector.multi_reduction <add>, %10, %cst_6 [1] : vector<8x128xf32> to vector<8xf32>
    %12 = vector.shape_cast %11 : vector<8xf32> to vector<8x1xf32>
    %13 = math.log %12 : vector<8x1xf32>
    %14 = vector.broadcast %13 : vector<8x1xf32> to vector<8x128xf32>
    %15 = arith.subf %9, %14 : vector<8x128xf32>
    %c0_7 = arith.constant 0 : index
    %c0_8 = arith.constant 0 : index
    %16 = vector.load %arg4[%c0_7, %c0_8] : memref<8x128xf32, #tpu.memory_space<vmem>>, vector<8x128xf32>
    tpu.vector_store %arg4[%c0_7, %c0_8], %15 {strides = array<i32>} : memref<8x128xf32, #tpu.memory_space<vmem>>, vector<8x128xf32>,
    return
  }
  func.func @transform_0(%arg0: i32) -> (i32, i32) {
    %c0_i32 = arith.constant 0 : i32
    %c0_i32_0 = arith.constant 0 : i32
    return %arg0, %c0_i32 : i32, i32
  }
  func.func @transform_1(%arg0: i32) -> (i32, i32) {
    %c0_i32 = arith.constant 0 : i32
    %c0_i32_0 = arith.constant 0 : i32
    %c0_i32_1 = arith.constant 0 : i32
    return %c0_i32, %c0_i32_0 : i32, i32
  }
  func.func @transform_2(%arg0: i32) -> (i32, i32) {
    %c0_i32 = arith.constant 0 : i32
    %c0_i32_0 = arith.constant 0 : i32
    %c0_i32_1 = arith.constant 0 : i32
    return %c0_i32, %c0_i32_0 : i32, i32
  }
  func.func @transform_3(%arg0: i32) -> (i32, i32) {
    %c0_i32 = arith.constant 0 : i32
    %c0_i32_0 = arith.constant 0 : i32
    return %arg0, %c0_i32 : i32, i32
  }
}

</mosaic_0001>

<llo_original>
// kernel: tpu_custom_call.1
$region0: #{tpu_custom_call.1}
  #allocation0 [shape = 'u32[]', space=smem, size = 0x4, offset = 0x4, fixed_abs, tag = 'smem constant byte address 0x4 - core index']
  #allocation1 [shape = 'u32[144,128]{1,0:T(1,128)}', space=vmem, size = 0x12000, scoped, tag = 'internal scratch']
  %s0 = inlined_call_operand.hbm [shape: f32[8,256], index: 0, kind: input, shape index: {}]
  %s1 = inlined_call_operand.hbm [shape: f32[256,128], index: 1, kind: input, shape index: {}]
  %s2 = inlined_call_operand.vmem [shape: f32[1,128], index: 2, kind: input, shape index: {}]
  %s3 = inlined_call_operand.hbm [shape: f32[8,128], index: 3, kind: output, shape index: {}]
  %s4 = sld [smem:[#allocation0]]
  $region30: #{tpu_custom_call.1} parent=0
    _
  %s6 = ssub.s32 1, %s4
  %s7 = scalar_select 0, %s6, %s4
  $region1: #{tpu_custom_call.1} parent=0
    #allocation2 [shape = 'u8[8192]{0}', space=vmem, size = 0x2000, scoped, tag = 'input window, operand 0, single buffered']
    #allocation3 [shape = 's32[1]{0}', space=sflag, size = 0x4, scoped, tag = 'scoped memory for tpu_custom_call.1']
    #allocation4 [shape = 's32[1]{0}', space=sflag, size = 0x4, scoped, tag = 'scoped memory for tpu_custom_call.1']
    #allocation5 [shape = 'u8[131072]{0}', space=vmem, size = 0x20000, scoped, tag = 'input window, operand 1, single buffered']
    #allocation6 [shape = 's32[1]{0}', space=sflag, size = 0x4, scoped, tag = 'scoped memory for tpu_custom_call.1']
    #allocation7 [shape = 'u8[4096]{0}', space=vmem, size = 0x1000, scoped, tag = 'output window, operand 0, single buffered']
    %8 = vsyncpa [#allocation3], 0
    %9 = vsyncpa [#allocation6], 0
    %10 = vsyncpa [#allocation4], 0
    // Predicated region
    $region2: #{tpu_custom_call.1} parent=1 // pred_check
      _
    $region3: #{tpu_custom_call.1} parent=1 // pred_check_branch
      %12 = sbr.rel (0) target = $region5
    $region4: #{tpu_custom_call.1} parent=1 // pred_region
      %s14 = ssub.s32 256, 256
      %15 = vsyncadd [#allocation3], %s14
      %s17 = sshll.u32 [#allocation2], 4
      %s18 = int_to_ptr.vmem [resolvable:$true] %s17
      %20 = dma.hbm_to_vmem [thread:$0]  %s0, 256, %s18, [#allocation3]
    $region5: #{tpu_custom_call.1} parent=1 // pred_fallthru
      _
    // Predicated region
    $region6: #{tpu_custom_call.1} parent=1 // pred_check
      _
    $region7: #{tpu_custom_call.1} parent=1 // pred_check_branch
      %22 = sbr.rel (0) target = $region9
    $region8: #{tpu_custom_call.1} parent=1 // pred_region
      %s24 = ssub.s32 4096, 4096
      %25 = vsyncadd [#allocation6], %s24
      %s26 = sshll.u32 [#allocation5], 4
      %s27 = int_to_ptr.vmem [resolvable:$true] %s26
      %32 = dma.hbm_to_vmem [thread:$0]  %s1, 4096, %s27, [#allocation6], 128, 128, 8
    $region9: #{tpu_custom_call.1} parent=1 // pred_fallthru
      _
    // Predicated region
    $region10: #{tpu_custom_call.1} parent=1 // pred_check
      _
    $region11: #{tpu_custom_call.1} parent=1 // pred_check_branch
      %34 = sbr.rel (0) target = $region13
    $region12: #{tpu_custom_call.1} parent=1 // pred_region
      _
    $region13: #{tpu_custom_call.1} parent=1 // pred_fallthru
      _
    // Predicated region
    $region14: #{tpu_custom_call.1} parent=1 // pred_check
      _
    $region15: #{tpu_custom_call.1} parent=1 // pred_check_branch
      %36 = sbr.rel (0) target = $region17
    $region16: #{tpu_custom_call.1} parent=1 // pred_region
      %37 = dma.done [#allocation3], 256
    $region17: #{tpu_custom_call.1} parent=1 // pred_fallthru
      _
    // Predicated region
    $region18: #{tpu_custom_call.1} parent=1 // pred_check
      _
    $region19: #{tpu_custom_call.1} parent=1 // pred_check_branch
      %39 = sbr.rel (0) target = $region21
    $region20: #{tpu_custom_call.1} parent=1 // pred_region
      %40 = dma.done [#allocation6], 4096
    $region21: #{tpu_custom_call.1} parent=1 // pred_fallthru
      _
    %v41 = vld [vmem:[#allocation2] sm:$0xff]
    %v42 = vld [vmem:[#allocation2 + $0x8] sm:$0xff]
    %v43 = vld [vmem:[#allocation5] sm:$0xff]
    %v44 = vld [vmem:[#allocation5 + $0x8] sm:$0xff]
    %v45 = vld [vmem:[#allocation5 + $0x10] sm:$0xff]
    %v46 = vld [vmem:[#allocation5 + $0x18] sm:$0xff]
    %v47 = vld [vmem:[#allocation5 + $0x20] sm:$0xff]
    %v48 = vld [vmem:[#allocation5 + $0x28] sm:$0xff]
    %v49 = vld [vmem:[#allocation5 + $0x30] sm:$0xff]
    %v50 = vld [vmem:[#allocation5 + $0x38] sm:$0xff]
    %v51 = vld [vmem:[#allocation5 + $0x40] sm:$0xff]
    %v52 = vld [vmem:[#allocation5 + $0x48] sm:$0xff]
    %v53 = vld [vmem:[#allocation5 + $0x50] sm:$0xff]
    %v54 = vld [vmem:[#allocation5 + $0x58] sm:$0xff]
    %v55 = vld [vmem:[#allocation5 + $0x60] sm:$0xff]
    %v56 = vld [vmem:[#allocation5 + $0x68] sm:$0xff]
    %v57 = vld [vmem:[#allocation5 + $0x70] sm:$0xff]
    %v58 = vld [vmem:[#allocation5 + $0x78] sm:$0xff]
    %v59 = vld [vmem:[#allocation5 + $0x80] sm:$0xff]
    %v60 = vld [vmem:[#allocation5 + $0x88] sm:$0xff]
    %v61 = vld [vmem:[#allocation5 + $0x90] sm:$0xff]
    %v62 = vld [vmem:[#allocation5 + $0x98] sm:$0xff]
    %v63 = vld [vmem:[#allocation5 + $0xa0] sm:$0xff]
    %v64 = vld [vmem:[#allocation5 + $0xa8] sm:$0xff]
    %v65 = vld [vmem:[#allocation5 + $0xb0] sm:$0xff]
    %v66 = vld [vmem:[#allocation5 + $0xb8] sm:$0xff]
    %v67 = vld [vmem:[#allocation5 + $0xc0] sm:$0xff]
    %v68 = vld [vmem:[#allocation5 + $0xc8] sm:$0xff]
    %v69 = vld [vmem:[#allocation5 + $0xd0] sm:$0xff]
    %v70 = vld [vmem:[#allocation5 + $0xd8] sm:$0xff]
    %v71 = vld [vmem:[#allocation5 + $0xe0] sm:$0xff]
    %v72 = vld [vmem:[#allocation5 + $0xe8] sm:$0xff]
    %v73 = vld [vmem:[#allocation5 + $0xf0] sm:$0xff]
    %v74 = vld [vmem:[#allocation5 + $0xf8] sm:$0xff]
    %v75 = vld [vmem:[%s2] sm:$0x1]
    %v77 = vlaneseq
    %v78 = vshrl.u32 %v77, 7
    %v79 = vsub.s32 0, %v78
    %v80 = vrot.slane %v75, %v79
    %82 = vmatprep.subr.mxu0 0.0
    %83 = vmatpush1.msra.mxu0 %v58
    %84 = vmatprep.subr.mxu0 0.0
    %85 = vmatpush1.msra.mxu0 %v57
    %86 = vmatprep.subr.mxu0 0.0
    %87 = vmatpush1.msra.mxu0 %v56
    %88 = vmatprep.subr.mxu0 0.0
    %89 = vmatpush1.msra.mxu0 %v55
    %90 = vmatprep.subr.mxu0 0.0
    %91 = vmatpush1.msra.mxu0 %v54
    %92 = vmatprep.subr.mxu0 0.0
    %93 = vmatpush1.msra.mxu0 %v53
    %94 = vmatprep.subr.mxu0 0.0
    %95 = vmatpush1.msra.mxu0 %v52
    %96 = vmatprep.subr.mxu0 0.0
    %97 = vmatpush1.msra.mxu0 %v51
    %98 = vmatprep.subr.mxu0 0.0
    %99 = vmatpush1.msra.mxu0 %v50
    %100 = vmatprep.subr.mxu0 0.0
    %101 = vmatpush1.msra.mxu0 %v49
    %102 = vmatprep.subr.mxu0 0.0
    %103 = vmatpush1.msra.mxu0 %v48
    %104 = vmatprep.subr.mxu0 0.0
    %105 = vmatpush1.msra.mxu0 %v47
    %106 = vmatprep.subr.mxu0 0.0
    %107 = vmatpush1.msra.mxu0 %v46
    %108 = vmatprep.subr.mxu0 0.0
    %109 = vmatpush1.msra.mxu0 %v45
    %110 = vmatprep.subr.mxu0 0.0
    %111 = vmatpush1.msra.mxu0 %v44
    %112 = vmatprep.subr.mxu0 0.0
    %113 = vmatpush1.msra.mxu0 %v43
    %114 = vmatprep.subr.mxu0 0.0
    %115 = vmatpush2.msra.mxu0 %v74
    %116 = vmatprep.subr.mxu0 0.0
    %117 = vmatpush2.msra.mxu0 %v73
    %118 = vmatprep.subr.mxu0 0.0
    %119 = vmatpush2.msra.mxu0 %v72
    %120 = vmatprep.subr.mxu0 0.0
    %121 = vmatpush2.msra.mxu0 %v71
    %122 = vmatprep.subr.mxu0 0.0
    %123 = vmatpush2.msra.mxu0 %v70
    %124 = vmatprep.subr.mxu0 0.0
    %125 = vmatpush2.msra.mxu0 %v69
    %126 = vmatprep.subr.mxu0 0.0
    %127 = vmatpush2.msra.mxu0 %v68
    %128 = vmatprep.subr.mxu0 0.0
    %129 = vmatpush2.msra.mxu0 %v67
    %130 = vmatprep.subr.mxu0 0.0
    %131 = vmatpush2.msra.mxu0 %v66
    %132 = vmatprep.subr.mxu0 0.0
    %133 = vmatpush2.msra.mxu0 %v65
    %134 = vmatprep.subr.mxu0 0.0
    %135 = vmatpush2.msra.mxu0 %v64
    %136 = vmatprep.subr.mxu0 0.0
    %137 = vmatpush2.msra.mxu0 %v63
    %138 = vmatprep.subr.mxu0 0.0
    %139 = vmatpush2.msra.mxu0 %v62
    %140 = vmatprep.subr.mxu0 0.0
    %141 = vmatpush2.msra.mxu0 %v61
    %142 = vmatprep.subr.mxu0 0.0
    %143 = vmatpush2.msra.mxu0 %v60
    %144 = vmatprep.subr.mxu0 0.0
    %145 = vmatpush2.msra.mxu0 %v59
    %146 = vmatprep.mubr.f32.mxu0 %v42
    %147 = vmatmul.mubr.f32.gmra.mxu0 %v41
    %v148 = vpop.f32.mrf.mxu0
    %v149 = vadd.f32 %v80, %v148
    %v150 = vpop.f32.mrf.mxu0
    %151 = vdwg.mxu0
    %152 = vmax.xlane.f32.xlu0 %v149
    %v153 = vpop.xlane.xlu0 %152
    %v154 = vsub.f32 %v149, %v153
    %v155 = vmul.f32 %v154, 1.442695
    %v156 = vpow.pop %v155
    %157 = vadd.xlane.f32.xlu0 %v156
    %v158 = vpop.xlane.xlu0 %157
    %v159 = vlog2.pop %v158
    %v160 = vmul.f32 %v159, 0.6931472
    %v161 = vsub.f32 %v154, %v160
    %162 = vst [vmem:[#allocation7] sm:$0xff] %v161
    // Predicated region
    $region22: #{tpu_custom_call.1} parent=1 // pred_check
      _
    $region23: #{tpu_custom_call.1} parent=1 // pred_check_branch
      %164 = sbr.rel (0) target = $region25
    $region24: #{tpu_custom_call.1} parent=1 // pred_region
      %s166 = ssub.s32 128, 128
      %167 = vsyncadd [#allocation4], %s166
      %s169 = sshll.u32 [#allocation7], 4
      %s170 = int_to_ptr.vmem [resolvable:$true] %s169
      %172 = dma.vmem_to_hbm [thread:$0]  %s170, 128, %s3, [#allocation4]
    $region25: #{tpu_custom_call.1} parent=1 // pred_fallthru
      _
    // Predicated region
    $region26: #{tpu_custom_call.1} parent=1 // pred_check
      _
    $region27: #{tpu_custom_call.1} parent=1 // pred_check_branch
      %174 = sbr.rel (0) target = $region29
    $region28: #{tpu_custom_call.1} parent=1 // pred_region
      %175 = dma.done [#allocation4], 128
    $region29: #{tpu_custom_call.1} parent=1 // pred_fallthru
      _
    %176 = vsyncpa [#allocation3], 1
    %177 = vsyncpa [#allocation6], 1
    %178 = vsyncpa [#allocation4], 1

</llo_original>
